<compile_context>
chip_gen: v5e
topology: v5e:2x2
jax: 0.10.0
libtpu: 0.0.40
codegen_flags: <defaults>
</compile_context>

<pallas_src>
import jax
import jax.numpy as jnp
from jax.experimental import pallas as pl
from jax.experimental.pallas import tpu as pltpu

NUM_CLASSES = 10
HIDDEN = 50
LANE = 128
SUBLANE = 8
# Per-buffer VMEM budget for the (double-buffered) x tile: keeps the total
# working set well under the 32 MiB scoped default on v5e/v6e/v7x.
_X_TILE_BYTES = 8 * 1024 * 1024


def _round_up(x, m):
    return ((x + m - 1) // m) * m


def _mlp_kernel(x_ref, w1_ref, b1_ref, w2_ref, b2_ref, o_ref):
    # x:  [TB, D_in]            (full, unpadded feature dim)
    # w1: [D_in, Hp]  b1: [1, Hp]   (hidden dim lane-padded to 128; bias f32)
    # w2: [Hp, C]     b2: [1, C]    (narrow C output, stored directly)
    # o:  [TB, C]
    x = x_ref[...].astype(w1_ref.dtype)              # in-kernel cast if bf16 path
    h = jnp.dot(x, w1_ref[...], preferred_element_type=jnp.float32)
    h = jnp.maximum(h + b1_ref[...], 0.0)            # f32 bias + ReLU (v5e-safe VPU)
    h = h.astype(w2_ref.dtype)
    y = jnp.dot(h, w2_ref[...], preferred_element_type=jnp.float32)
    o_ref[...] = (y + b2_ref[...]).astype(o_ref.dtype)


def prepare_params(w1, b1, w2, b2, *, use_bf16=False):
    """Pad/cast the weights once (hoisted out of the per-call path).

    w1: [D_in, H], b1: [H], w2: [H, C], b2: [C]
    Only the hidden dim H is padded (to 128 lanes); padded w1 columns / b1
    entries are zero, so relu(0)=0 and padded hidden lanes contribute nothing.
    """
    D_in, H = w1.shape
    C = w2.shape[1]
    Hp = _round_up(H, LANE)
    mm_dtype = jnp.bfloat16 if use_bf16 else jnp.float32
    w1_p = jnp.pad(w1.astype(mm_dtype), ((0, 0), (0, Hp - H)))
    w2_p = jnp.pad(w2.astype(mm_dtype), ((0, Hp - H), (0, 0)))
    # Biases stay f32 so the epilogue is full-width f32 VPU work on all chips.
    b1_p = jnp.pad(b1.astype(jnp.float32), (0, Hp - H)).reshape(1, Hp)
    b2_p = b2.astype(jnp.float32).reshape(1, C)
    return (w1_p, b1_p, w2_p, b2_p)


def nn_forward_prepared(x, params, *, block_b=2048):
    """Fused forward using pre-padded params from prepare_params()."""
    w1_p, b1_p, w2_p, b2_p = params
    B, D_in = x.shape
    assert w1_p.shape[0] == D_in
    Hp = w1_p.shape[1]
    C = w2_p.shape[1]

    # Cap the batch tile so the double-buffered x tile stays within budget.
    row_bytes = max(1, D_in * x.dtype.itemsize)
    tb_cap = max(SUBLANE, (_X_TILE_BYTES // row_bytes) // SUBLANE * SUBLANE)
    block_b_eff = max(SUBLANE, min(block_b, tb_cap))

    # Balanced tiles: bounds batch padding to <8 rows/tile at adversarial B,
    # and gives the two v7x TensorCores >=2 grid steps to shard when B is big.
    n_tiles = max(1, pl.cdiv(B, block_b_eff))
    if n_tiles == 1 and B >= 256:
        n_tiles = 2
    TB = _round_up(pl.cdiv(B, n_tiles), SUBLANE)
    Bp = TB * n_tiles

    x_in = x if Bp == B else jnp.pad(x, ((0, Bp - B), (0, 0)))

    w_itemsize = jnp.dtype(w1_p.dtype).itemsize
    cost = pl.CostEstimate(
        flops=2 * B * (D_in * Hp + Hp * C),
        transcendentals=0,
        bytes_accessed=(Bp * D_in * x.dtype.itemsize          # x read
                        + Bp * C * 4                          # out write
                        + (D_in * Hp + Hp * C) * w_itemsize   # weights
                        + (Hp + C) * 4),                      # biases
    )

    out = pl.pallas_call(
        _mlp_kernel,
        out_shape=jax.ShapeDtypeStruct((Bp, C), jnp.float32),
        grid_spec=pl.GridSpec(
            grid=(n_tiles,),
            in_specs=[
                pl.BlockSpec((TB, D_in), lambda i: (i, 0)),   # x: batch-tiled, no lane pad
                pl.BlockSpec((D_in, Hp), lambda i: (0, 0)),   # w1: VMEM-resident
                pl.BlockSpec((1, Hp), lambda i: (0, 0)),      # b1: VMEM-resident
                pl.BlockSpec((Hp, C), lambda i: (0, 0)),      # w2: VMEM-resident
                pl.BlockSpec((1, C), lambda i: (0, 0)),       # b2: VMEM-resident
            ],
            out_specs=pl.BlockSpec((TB, C), lambda i: (i, 0)),  # narrow output, no post-slice
        ),
        compiler_params=pltpu.CompilerParams(
            dimension_semantics=("parallel",),  # v7x: shard batch tiles across TCs
        ),
        cost_estimate=cost,
    )(x_in, w1_p, b1_p, w2_p, b2_p)

    return out if Bp == B else out[:B]


def nn_forward(x, w1, b1, w2, b2, *, block_b=2048, use_bf16=False):
    """Convenience one-shot API.

    x: [B, D_in] float32; w1: [D_in, H]; b1: [H]; w2: [H, C]; b2: [C]
    For repeated calls, use prepare_params() once + nn_forward_prepared().
    Set use_bf16=True for large-B inference on v6e/v7x (f32 accumulate kept;
    expect ~1e-2-level deviation from the f32 reference).
    """
    params = prepare_params(w1, b1, w2, b2, use_bf16=use_bf16)
    return nn_forward_prepared(x, params, block_b=block_b)


def _ref_forward(x, w1, b1, w2, b2):
    h = jnp.maximum(x @ w1 + b1, 0.0)
    return h @ w2 + b2


if __name__ == "__main__":
    key = jax.random.PRNGKey(0)
    B, D_in = 8, 32

    k_x, k_w1, k_b1, k_w2, k_b2 = jax.random.split(key, 5)
    x = jax.random.normal(k_x, (B, D_in), dtype=jnp.float32)

    # Deterministic "PyTorch-like" init: uniform(-1/sqrt(fan_in), 1/sqrt(fan_in))
    lim1 = 1.0 / jnp.sqrt(D_in)
    w1 = jax.random.uniform(k_w1, (D_in, HIDDEN), jnp.float32, -lim1, lim1)
    b1 = jax.random.uniform(k_b1, (HIDDEN,), jnp.float32, -lim1, lim1)
    lim2 = 1.0 / jnp.sqrt(HIDDEN)
    w2 = jax.random.uniform(k_w2, (HIDDEN, NUM_CLASSES), jnp.float32, -lim2, lim2)
    b2 = jax.random.uniform(k_b2, (NUM_CLASSES,), jnp.float32, -lim2, lim2)

    params = prepare_params(w1, b1, w2, b2)          # hoisted weight prep
    out = nn_forward_prepared(x, params)
    jax.block_until_ready(out)

    ref = _ref_forward(x, w1, b1, w2, b2)
    assert out.shape == (B, NUM_CLASSES)
    assert jnp.allclose(out, ref, atol=1e-5, rtol=1e-5), (
        float(jnp.max(jnp.abs(out - ref)))
    )
    print("KERNEL_OK")
</pallas_src>

<mosaic_0001>
module attributes {stable_mosaic.version = 11 : i64} {
  func.func @_mlp_kernel(%arg0: i32, %arg1: memref<8x32xf32, #tpu.memory_space<vmem>>, %arg2: memref<32x128xf32, #tpu.memory_space<vmem>>, %arg3: memref<1x128xf32, #tpu.memory_space<vmem>>, %arg4: memref<128x10xf32, #tpu.memory_space<vmem>>, %arg5: memref<1x10xf32, #tpu.memory_space<vmem>>, %arg6: memref<8x10xf32, #tpu.memory_space<vmem>>) attributes {dimension_semantics = [#tpu.dimension_semantics<parallel>], iteration_bounds = array<i64: 1>, scalar_prefetch = 0 : i64, scratch_operands = 0 : i64, tpu.core_type = #tpu.core_type<tc>, window_params = [{transform_indices = @transform_0, window_bounds = array<i64: 8, 32>}, {pipeline_mode = #tpu.pipeline_mode<synchronous>, transform_indices = @transform_1, window_bounds = array<i64: 32, 128>}, {pipeline_mode = #tpu.pipeline_mode<synchronous>, transform_indices = @transform_2, window_bounds = array<i64: 1, 128>}, {pipeline_mode = #tpu.pipeline_mode<synchronous>, transform_indices = @transform_3, window_bounds = array<i64: 128, 10>}, {pipeline_mode = #tpu.pipeline_mode<synchronous>, transform_indices = @transform_4, window_bounds = array<i64: 1, 10>}, {transform_indices = @transform_5, window_bounds = array<i64: 8, 10>}]} {
    %c0 = arith.constant 0 : index
    %c0_0 = arith.constant 0 : index
    %0 = vector.load %arg1[%c0, %c0_0] : memref<8x32xf32, #tpu.memory_space<vmem>>, vector<8x32xf32>
    %c0_1 = arith.constant 0 : index
    %c0_2 = arith.constant 0 : index
    %1 = vector.load %arg2[%c0_1, %c0_2] : memref<32x128xf32, #tpu.memory_space<vmem>>, vector<32x128xf32>
    %cst = arith.constant dense<0.000000e+00> : vector<8x128xf32>
    %2 = tpu.matmul %0, %1, %cst {dimension_numbers = #tpu.dot_dimension_numbers<[1], [0], [0], [1], [0, 0, 1, 1], [], []>} : vector<8x32xf32>, vector<32x128xf32>, vector<8x128xf32> -> vector<8x128xf32>
    %c0_3 = arith.constant 0 : index
    %c0_4 = arith.constant 0 : index
    %3 = vector.load %arg3[%c0_3, %c0_4] : memref<1x128xf32, #tpu.memory_space<vmem>>, vector<1x128xf32>
    %4 = vector.broadcast %3 : vector<1x128xf32> to vector<8x128xf32>
    %5 = arith.addf %2, %4 : vector<8x128xf32>
    %cst_5 = arith.constant 0.000000e+00 : f32
    %6 = vector.broadcast %cst_5 : f32 to vector<8x128xf32>
    %7 = arith.maximumf %5, %6 : vector<8x128xf32>
    %c0_6 = arith.constant 0 : index
    %c0_7 = arith.constant 0 : index
    %8 = vector.load %arg4[%c0_6, %c0_7] : memref<128x10xf32, #tpu.memory_space<vmem>>, vector<128x10xf32>
    %cst_8 = arith.constant dense<0.000000e+00> : vector<8x10xf32>
    %9 = tpu.matmul %7, %8, %cst_8 {dimension_numbers = #tpu.dot_dimension_numbers<[1], [0], [0], [1], [0, 0, 1, 1], [], []>} : vector<8x128xf32>, vector<128x10xf32>, vector<8x10xf32> -> vector<8x10xf32>
    %c0_9 = arith.constant 0 : index
    %c0_10 = arith.constant 0 : index
    %10 = vector.load %arg5[%c0_9, %c0_10] : memref<1x10xf32, #tpu.memory_space<vmem>>, vector<1x10xf32>
    %11 = vector.broadcast %10 : vector<1x10xf32> to vector<8x10xf32>
    %12 = arith.addf %9, %11 : vector<8x10xf32>
    %c0_11 = arith.constant 0 : index
    %c0_12 = arith.constant 0 : index
    %13 = vector.load %arg6[%c0_11, %c0_12] : memref<8x10xf32, #tpu.memory_space<vmem>>, vector<8x10xf32>
    tpu.vector_store %arg6[%c0_11, %c0_12], %12 {strides = array<i32>} : memref<8x10xf32, #tpu.memory_space<vmem>>, vector<8x10xf32>,
    return
  }
  func.func @transform_0(%arg0: i32) -> (i32, i32) {
    %c0_i32 = arith.constant 0 : i32
    %c0_i32_0 = arith.constant 0 : i32
    return %arg0, %c0_i32 : i32, i32
  }
  func.func @transform_1(%arg0: i32) -> (i32, i32) {
    %c0_i32 = arith.constant 0 : i32
    %c0_i32_0 = arith.constant 0 : i32
    %c0_i32_1 = arith.constant 0 : i32
    return %c0_i32, %c0_i32_0 : i32, i32
  }
  func.func @transform_2(%arg0: i32) -> (i32, i32) {
    %c0_i32 = arith.constant 0 : i32
    %c0_i32_0 = arith.constant 0 : i32
    %c0_i32_1 = arith.constant 0 : i32
    return %c0_i32, %c0_i32_0 : i32, i32
  }
  func.func @transform_3(%arg0: i32) -> (i32, i32) {
    %c0_i32 = arith.constant 0 : i32
    %c0_i32_0 = arith.constant 0 : i32
    %c0_i32_1 = arith.constant 0 : i32
    return %c0_i32, %c0_i32_0 : i32, i32
  }
  func.func @transform_4(%arg0: i32) -> (i32, i32) {
    %c0_i32 = arith.constant 0 : i32
    %c0_i32_0 = arith.constant 0 : i32
    %c0_i32_1 = arith.constant 0 : i32
    return %c0_i32, %c0_i32_0 : i32, i32
  }
  func.func @transform_5(%arg0: i32) -> (i32, i32) {
    %c0_i32 = arith.constant 0 : i32
    %c0_i32_0 = arith.constant 0 : i32
    return %arg0, %c0_i32 : i32, i32
  }
}

</mosaic_0001>

<llo_original>
// kernel: tpu_custom_call.1
$region0: #{tpu_custom_call.1}
  #allocation0 [shape = 'u32[]', space=smem, size = 0x4, offset = 0x4, fixed_abs, tag = 'smem constant byte address 0x4 - core index']
  #allocation1 [shape = 'u32[72,128]{1,0:T(1,128)}', space=vmem, size = 0x9000, scoped, tag = 'internal scratch']
  %s0 = inlined_call_operand.vmem [shape: f32[8,32], index: 0, kind: input, shape index: {}]
  %s1 = inlined_call_operand.vmem [shape: f32[32,128], index: 1, kind: input, shape index: {}]
  %s2 = inlined_call_operand.vmem [shape: f32[1,128], index: 2, kind: input, shape index: {}]
  %s3 = inlined_call_operand.vmem [shape: f32[128,10], index: 3, kind: input, shape index: {}]
  %s4 = inlined_call_operand.vmem [shape: f32[1,10], index: 4, kind: input, shape index: {}]
  %s5 = inlined_call_operand.hbm [shape: f32[8,10], index: 5, kind: output, shape index: {}]
  %s6 = sld [smem:[#allocation0]]
  $region30: #{tpu_custom_call.1} parent=0
    _
  %s8 = ssub.s32 1, %s6
  %s9 = scalar_select 0, %s8, %s6
  $region1: #{tpu_custom_call.1} parent=0
    #allocation2 [shape = 'u8[4096]{0}', space=vmem, size = 0x1000, scoped, tag = 'output window, operand 0, single buffered']
    #allocation3 [shape = 's32[1]{0}', space=sflag, size = 0x4, scoped, tag = 'scoped memory for tpu_custom_call.1']
    %10 = vsyncpa [#allocation3], 0
    // Predicated region
    $region2: #{tpu_custom_call.1} parent=1 // pred_check
      _
    $region3: #{tpu_custom_call.1} parent=1 // pred_check_branch
      %12 = sbr.rel (0) target = $region5
    $region4: #{tpu_custom_call.1} parent=1 // pred_region
      _
    $region5: #{tpu_custom_call.1} parent=1 // pred_fallthru
      _
    // Predicated region
    $region6: #{tpu_custom_call.1} parent=1 // pred_check
      _
    $region7: #{tpu_custom_call.1} parent=1 // pred_check_branch
      %14 = sbr.rel (0) target = $region9
    $region8: #{tpu_custom_call.1} parent=1 // pred_region
      _
    $region9: #{tpu_custom_call.1} parent=1 // pred_fallthru
      _
    // Predicated region
    $region10: #{tpu_custom_call.1} parent=1 // pred_check
      _
    $region11: #{tpu_custom_call.1} parent=1 // pred_check_branch
      %16 = sbr.rel (0) target = $region13
    $region12: #{tpu_custom_call.1} parent=1 // pred_region
      _
    $region13: #{tpu_custom_call.1} parent=1 // pred_fallthru
      _
    // Predicated region
    $region14: #{tpu_custom_call.1} parent=1 // pred_check
      _
    $region15: #{tpu_custom_call.1} parent=1 // pred_check_branch
      %18 = sbr.rel (0) target = $region17
    $region16: #{tpu_custom_call.1} parent=1 // pred_region
      _
    $region17: #{tpu_custom_call.1} parent=1 // pred_fallthru
      _
    // Predicated region
    $region18: #{tpu_custom_call.1} parent=1 // pred_check
      _
    $region19: #{tpu_custom_call.1} parent=1 // pred_check_branch
      %20 = sbr.rel (0) target = $region21
    $region20: #{tpu_custom_call.1} parent=1 // pred_region
      _
    $region21: #{tpu_custom_call.1} parent=1 // pred_fallthru
      _
    %v21 = vld [vmem:[%s0] sm:$0xff]
    %v22 = vld [vmem:[%s1] sm:$0xff]
    %v23 = vld [vmem:[%s1 + $0x8] sm:$0xff]
    %v24 = vld [vmem:[%s1 + $0x10] sm:$0xff]
    %v25 = vld [vmem:[%s1 + $0x18] sm:$0xff]
    %v26 = vld [vmem:[%s2] sm:$0x1]
    %v28 = vperm.slane %v26, 0
    %vm30 = vcmask 261120
    %v32 = vsel %vm30, %v21, 0
    %34 = vmatpush.msra.mxu0 0.0
    %35 = vmatpush.msra.mxu0 0.0
    %36 = vmatpush.msra.mxu0 0.0
    %37 = vmatpush.msra.mxu0 0.0
    %38 = vmatpush.msra.mxu0 0.0
    %39 = vmatpush.msra.mxu0 0.0
    %40 = vmatpush.msra.mxu0 0.0
    %41 = vmatpush.msra.mxu0 0.0
    %42 = vmatpush.msra.mxu0 0.0
    %43 = vmatpush.msra.mxu0 0.0
    %44 = vmatpush.msra.mxu0 0.0
    %45 = vmatpush.msra.mxu0 0.0
    %46 = vmatpush.msra.mxu0 %v25
    %47 = vmatpush.msra.mxu0 %v24
    %48 = vmatpush.msra.mxu0 %v23
    %49 = vmatpush.msra.mxu0 %v22
    %50 = vmatmul.f32.gmra.mxu0 %v32
    %v51 = vpop.f32.mrf.mxu0
    %v52 = vadd.f32 %v28, %v51
    %53 = vdwg.mxu0
    %v54 = vmax.f32 %v52, 0.0
    %v55 = vld [vmem:[%s3] sm:$0xff]
    %v56 = vld [vmem:[%s3 + $0x8] sm:$0xff]
    %v57 = vld [vmem:[%s3 + $0x10] sm:$0xff]
    %v58 = vld [vmem:[%s3 + $0x18] sm:$0xff]
    %v59 = vld [vmem:[%s3 + $0x20] sm:$0xff]
    %v60 = vld [vmem:[%s3 + $0x28] sm:$0xff]
    %v61 = vld [vmem:[%s3 + $0x30] sm:$0xff]
    %v62 = vld [vmem:[%s3 + $0x38] sm:$0xff]
    %v63 = vld [vmem:[%s3 + $0x40] sm:$0xff]
    %v64 = vld [vmem:[%s3 + $0x48] sm:$0xff]
    %v65 = vld [vmem:[%s3 + $0x50] sm:$0xff]
    %v66 = vld [vmem:[%s3 + $0x58] sm:$0xff]
    %v67 = vld [vmem:[%s3 + $0x60] sm:$0xff]
    %v68 = vld [vmem:[%s3 + $0x68] sm:$0xff]
    %v69 = vld [vmem:[%s3 + $0x70] sm:$0xff]
    %v70 = vld [vmem:[%s3 + $0x78] sm:$0xff]
    %v71 = vld [vmem:[%s4] sm:$0x1]
    %v73 = vperm.slane %v71, 0
    %75 = vmatpush.msra.mxu0 %v70
    %76 = vmatpush.msra.mxu0 %v69
    %77 = vmatpush.msra.mxu0 %v68
    %78 = vmatpush.msra.mxu0 %v67
    %79 = vmatpush.msra.mxu0 %v66
    %80 = vmatpush.msra.mxu0 %v65
    %81 = vmatpush.msra.mxu0 %v64
    %82 = vmatpush.msra.mxu0 %v63
    %83 = vmatpush.msra.mxu0 %v62
    %84 = vmatpush.msra.mxu0 %v61
    %85 = vmatpush.msra.mxu0 %v60
    %86 = vmatpush.msra.mxu0 %v59
    %87 = vmatpush.msra.mxu0 %v58
    %88 = vmatpush.msra.mxu0 %v57
    %89 = vmatpush.msra.mxu0 %v56
    %90 = vmatpush.msra.mxu0 %v55
    %91 = vmatmul.f32.gmra.mxu0 %v54
    %v92 = vpop.f32.mrf.mxu0
    %v93 = vadd.f32 %v73, %v92
    %94 = vdwg.mxu0
    %vm95 = vcmask 80896
    %96 = vst.msk [vmem:[#allocation2] sm:$0xff] %vm95, %v93
    // Predicated region
    $region22: #{tpu_custom_call.1} parent=1 // pred_check
      _
    $region23: #{tpu_custom_call.1} parent=1 // pred_check_branch
      %98 = sbr.rel (0) target = $region25
    $region24: #{tpu_custom_call.1} parent=1 // pred_region
      %100 = vsyncadd [#allocation3], 0
      %s102 = sshll.u32 [#allocation2], 4
      %s103 = int_to_ptr.vmem [resolvable:$true] %s102
      %s104 = sshll.u32 %s5, 4
      %s105 = int_to_ptr.hbm [resolvable:$true] %s104
      %107 = dma.vmem_to_hbm [thread:$0]  %s103, 128, %s105, [#allocation3]
    $region25: #{tpu_custom_call.1} parent=1 // pred_fallthru
      _
    // Predicated region
    $region26: #{tpu_custom_call.1} parent=1 // pred_check
      _
    $region27: #{tpu_custom_call.1} parent=1 // pred_check_branch
      %109 = sbr.rel (0) target = $region29
    $region28: #{tpu_custom_call.1} parent=1 // pred_region
      %111 = dma.done [#allocation3], 128
    $region29: #{tpu_custom_call.1} parent=1 // pred_fallthru
      _
    %112 = vsyncpa [#allocation3], 1

</llo_original>
